<compile_context>
chip_gen: v5e
topology: v5e:2x2
jax: 0.10.0
libtpu: 0.0.40
codegen_flags: <defaults>
</compile_context>

<pallas_src>
import jax
import jax.numpy as jnp
from jax.experimental import pallas as pl
from jax.experimental.pallas import tpu as pltpu


def _round_up(x, m):
    return ((x + m - 1) // m) * m


def _sublane(dtype):
    # Packed sublane tile: 8 for 4-byte, 16 for 2-byte, 32 for 1-byte dtypes.
    return max(8, 32 // jnp.dtype(dtype).itemsize)


def _id_kernel_split_w(sf_ref, st_ref, w_top_ref, w_bot_ref, b_ref, out_ref):
    # concat([sf, st], -1) @ W == sf @ W[:S] + st @ W[S:]; the halves arrive as two
    # BlockSpec views of the same weight array (clean layouts, no VMEM repack).
    acc = jnp.broadcast_to(b_ref[...].astype(jnp.float32), out_ref.shape)
    acc = acc + jnp.dot(sf_ref[...], w_top_ref[...], preferred_element_type=jnp.float32)
    acc = acc + jnp.dot(st_ref[...], w_bot_ref[...], preferred_element_type=jnp.float32)
    out_ref[...] = acc.astype(out_ref.dtype)


def _id_kernel_full_w(sf_ref, st_ref, w_ref, b_ref, out_ref):
    # Fallback when S is not a multiple of the packed sublane tile: static in-kernel
    # views of the single [2S, A_pad] weight block.
    S = sf_ref.shape[-1]
    acc = jnp.broadcast_to(b_ref[...].astype(jnp.float32), out_ref.shape)
    acc = acc + jnp.dot(sf_ref[...], w_ref[:S, :], preferred_element_type=jnp.float32)
    acc = acc + jnp.dot(st_ref[...], w_ref[S:, :], preferred_element_type=jnp.float32)
    out_ref[...] = acc.astype(out_ref.dtype)


def inverse_dynamic_forward(state_from, state_to, w, b, *,
                            compute_dtype=None, return_padded=False):
    """Pallas forward: action_logits = concat(state_from, state_to) @ w + b."""
    B, S = state_from.shape
    A = w.shape[1]
    assert w.shape[0] == 2 * S
    assert state_to.shape == (B, S)
    out_dtype = state_from.dtype

    # Optional bf16 cast at the kernel boundary (f32 accumulation stays inside).
    if compute_dtype is not None:
        state_from = state_from.astype(compute_dtype)
        state_to = state_to.astype(compute_dtype)
        w = w.astype(compute_dtype)
    cdt = state_from.dtype
    sub = _sublane(cdt)
    bpe = jnp.dtype(cdt).itemsize

    # Lane-dense output: pad the (tiny) weight/bias action dim to a multiple of 128
    # so stores are unmasked full-lane writes. States are never padded.
    A_pad = _round_up(A, 128)
    if A_pad != A:
        w = jnp.pad(w, ((0, 0), (0, A_pad - A)))
        b = jnp.pad(b, ((0, A_pad - A),))
    b2d = b.reshape(1, A_pad).astype(jnp.float32)

    # Whole action dim resident in VMEM (always true for an RL head) -> 1-D grid
    # over batch tiles; weight & bias are DMA'd once (constant block index).
    tn = A_pad

    # Batch tile: multiple of the sublane tile, capped so the per-step footprint
    # (double-buffered inputs + weights + out + f32 acc) fits v5e's 16 MiB default
    # scoped VMEM with headroom.
    tm = min(512, _round_up(B, sub))

    def _vmem_est(tm_):
        states = 2 * 2 * tm_ * S * bpe                 # 2 state inputs, double-buffered
        weights = 2 * 2 * S * tn * bpe                 # 2 half views, double-buffered
        bias = 2 * tn * 4
        out_buf = 2 * tm_ * tn * jnp.dtype(out_dtype).itemsize
        acc = tm_ * tn * 4
        return states + weights + bias + out_buf + acc

    budget = 12 * 1024 * 1024
    while tm > sub and _vmem_est(tm) > budget:
        tm //= 2
    tm = max(sub, _round_up(tm, sub))

    grid = (pl.cdiv(B, tm),)  # ragged last block handled (masked) by Pallas

    split_w = (S % sub == 0)
    if split_w:
        kernel = _id_kernel_split_w
        in_specs = [
            pl.BlockSpec((tm, S), lambda i: (i, 0)),      # state_from tile
            pl.BlockSpec((tm, S), lambda i: (i, 0)),      # state_to tile
            pl.BlockSpec((S, tn), lambda i: (0, 0)),      # W top half (constant idx)
            pl.BlockSpec((S, tn), lambda i: (1, 0)),      # W bottom half (constant idx)
            pl.BlockSpec((1, tn), lambda i: (0, 0)),      # bias (constant idx)
        ]
        args = (state_from, state_to, w, w, b2d)
    else:
        # TODO(synk): non-sublane-aligned S with packed dtypes may trigger a VMEM
        # repack of the in-kernel slice; pad S upstream if this path gets hot.
        kernel = _id_kernel_full_w
        in_specs = [
            pl.BlockSpec((tm, S), lambda i: (i, 0)),
            pl.BlockSpec((tm, S), lambda i: (i, 0)),
            pl.BlockSpec((2 * S, tn), lambda i: (0, 0)),
            pl.BlockSpec((1, tn), lambda i: (0, 0)),
        ]
        args = (state_from, state_to, w, b2d)

    out = pl.pallas_call(
        kernel,
        out_shape=jax.ShapeDtypeStruct((B, A_pad), out_dtype),
        grid=grid,
        in_specs=in_specs,
        out_specs=pl.BlockSpec((tm, tn), lambda i: (i, 0)),
        compiler_params=pltpu.CompilerParams(
            dimension_semantics=("parallel",),   # batch blocks split across TCs (v7x)
        ),
    )(*args)

    if return_padded or A_pad == A:
        return out
    return out[:, :A]


def make_params(state_size, action_size, key):
    """Deterministic, PyTorch-Linear-like init for the synthetic head."""
    kw, kb = jax.random.split(key)
    fan_in = 2 * state_size
    bound = 1.0 / jnp.sqrt(jnp.float32(fan_in))
    w = jax.random.uniform(kw, (2 * state_size, action_size),
                           minval=-bound, maxval=bound, dtype=jnp.float32)
    b = jax.random.uniform(kb, (action_size,),
                           minval=-bound, maxval=bound, dtype=jnp.float32)
    return w, b


if __name__ == "__main__":
    batch = 8
    state_size = 32
    action_size = 16

    key = jax.random.PRNGKey(0)
    k_sf, k_st, k_params = jax.random.split(key, 3)

    state_from = jax.random.normal(k_sf, (batch, state_size), dtype=jnp.float32)
    state_to = jax.random.normal(k_st, (batch, state_size), dtype=jnp.float32)
    w, b = make_params(state_size, action_size, k_params)

    ref = jnp.concatenate([state_from, state_to], axis=-1) @ w + b

    # f32 path.
    out = inverse_dynamic_forward(state_from, state_to, w, b)
    out = jax.block_until_ready(out)
    assert out.shape == (batch, action_size)
    assert jnp.allclose(out, ref, atol=1e-5, rtol=1e-5)

    # bf16 compute path (f32 accumulation) — loosened tolerance.
    out_bf16 = inverse_dynamic_forward(state_from, state_to, w, b,
                                       compute_dtype=jnp.bfloat16)
    out_bf16 = jax.block_until_ready(out_bf16)
    assert jnp.allclose(out_bf16, ref, atol=5e-2, rtol=5e-2)

    # Ragged batch (not a multiple of the sublane tile) — exercises the masked
    # edge block of the cdiv grid.
    B2 = 13
    sf2 = jax.random.normal(jax.random.PRNGKey(1), (B2, state_size), dtype=jnp.float32)
    st2 = jax.random.normal(jax.random.PRNGKey(2), (B2, state_size), dtype=jnp.float32)
    ref2 = jnp.concatenate([sf2, st2], axis=-1) @ w + b
    out2 = jax.block_until_ready(inverse_dynamic_forward(sf2, st2, w, b))
    assert out2.shape == (B2, action_size)
    assert jnp.allclose(out2, ref2, atol=1e-5, rtol=1e-5)

    print("KERNEL_OK")
</pallas_src>

<mosaic_0001>
module attributes {stable_mosaic.version = 11 : i64} {
  func.func @_id_kernel_split_w(%arg0: i32, %arg1: memref<8x32xf32, #tpu.memory_space<vmem>>, %arg2: memref<8x32xf32, #tpu.memory_space<vmem>>, %arg3: memref<32x128xf32, #tpu.memory_space<vmem>>, %arg4: memref<32x128xf32, #tpu.memory_space<vmem>>, %arg5: memref<1x128xf32, #tpu.memory_space<vmem>>, %arg6: memref<8x128xf32, #tpu.memory_space<vmem>>) attributes {dimension_semantics = [#tpu.dimension_semantics<parallel>], iteration_bounds = array<i64: 1>, scalar_prefetch = 0 : i64, scratch_operands = 0 : i64, tpu.core_type = #tpu.core_type<tc>, window_params = [{transform_indices = @transform_0, window_bounds = array<i64: 8, 32>}, {transform_indices = @transform_1, window_bounds = array<i64: 8, 32>}, {transform_indices = @transform_2, window_bounds = array<i64: 32, 128>}, {transform_indices = @transform_3, window_bounds = array<i64: 32, 128>}, {pipeline_mode = #tpu.pipeline_mode<synchronous>, transform_indices = @transform_4, window_bounds = array<i64: 1, 128>}, {transform_indices = @transform_5, window_bounds = array<i64: 8, 128>}]} {
    %c0 = arith.constant 0 : index
    %c0_0 = arith.constant 0 : index
    %0 = vector.load %arg5[%c0, %c0_0] : memref<1x128xf32, #tpu.memory_space<vmem>>, vector<1x128xf32>
    %1 = vector.shape_cast %0 : vector<1x128xf32> to vector<1x128xf32>
    %2 = vector.broadcast %1 : vector<1x128xf32> to vector<8x128xf32>
    %c0_1 = arith.constant 0 : index
    %c0_2 = arith.constant 0 : index
    %3 = vector.load %arg1[%c0_1, %c0_2] : memref<8x32xf32, #tpu.memory_space<vmem>>, vector<8x32xf32>
    %c0_3 = arith.constant 0 : index
    %c0_4 = arith.constant 0 : index
    %4 = vector.load %arg3[%c0_3, %c0_4] : memref<32x128xf32, #tpu.memory_space<vmem>>, vector<32x128xf32>
    %cst = arith.constant dense<0.000000e+00> : vector<8x128xf32>
    %5 = tpu.matmul %3, %4, %cst {dimension_numbers = #tpu.dot_dimension_numbers<[1], [0], [0], [1], [0, 0, 1, 1], [], []>} : vector<8x32xf32>, vector<32x128xf32>, vector<8x128xf32> -> vector<8x128xf32>
    %6 = arith.addf %2, %5 : vector<8x128xf32>
    %c0_5 = arith.constant 0 : index
    %c0_6 = arith.constant 0 : index
    %7 = vector.load %arg2[%c0_5, %c0_6] : memref<8x32xf32, #tpu.memory_space<vmem>>, vector<8x32xf32>
    %c0_7 = arith.constant 0 : index
    %c0_8 = arith.constant 0 : index
    %8 = vector.load %arg4[%c0_7, %c0_8] : memref<32x128xf32, #tpu.memory_space<vmem>>, vector<32x128xf32>
    %cst_9 = arith.constant dense<0.000000e+00> : vector<8x128xf32>
    %9 = tpu.matmul %7, %8, %cst_9 {dimension_numbers = #tpu.dot_dimension_numbers<[1], [0], [0], [1], [0, 0, 1, 1], [], []>} : vector<8x32xf32>, vector<32x128xf32>, vector<8x128xf32> -> vector<8x128xf32>
    %10 = arith.addf %6, %9 : vector<8x128xf32>
    %c0_10 = arith.constant 0 : index
    %c0_11 = arith.constant 0 : index
    %11 = vector.load %arg6[%c0_10, %c0_11] : memref<8x128xf32, #tpu.memory_space<vmem>>, vector<8x128xf32>
    tpu.vector_store %arg6[%c0_10, %c0_11], %10 {strides = array<i32>} : memref<8x128xf32, #tpu.memory_space<vmem>>, vector<8x128xf32>,
    return
  }
  func.func @transform_0(%arg0: i32) -> (i32, i32) {
    %c0_i32 = arith.constant 0 : i32
    %c0_i32_0 = arith.constant 0 : i32
    return %arg0, %c0_i32 : i32, i32
  }
  func.func @transform_1(%arg0: i32) -> (i32, i32) {
    %c0_i32 = arith.constant 0 : i32
    %c0_i32_0 = arith.constant 0 : i32
    return %arg0, %c0_i32 : i32, i32
  }
  func.func @transform_2(%arg0: i32) -> (i32, i32) {
    %c0_i32 = arith.constant 0 : i32
    %c0_i32_0 = arith.constant 0 : i32
    %c0_i32_1 = arith.constant 0 : i32
    return %c0_i32, %c0_i32_0 : i32, i32
  }
  func.func @transform_3(%arg0: i32) -> (i32, i32) {
    %c1_i32 = arith.constant 1 : i32
    %c0_i32 = arith.constant 0 : i32
    %c0_i32_0 = arith.constant 0 : i32
    return %c1_i32, %c0_i32 : i32, i32
  }
  func.func @transform_4(%arg0: i32) -> (i32, i32) {
    %c0_i32 = arith.constant 0 : i32
    %c0_i32_0 = arith.constant 0 : i32
    %c0_i32_1 = arith.constant 0 : i32
    return %c0_i32, %c0_i32_0 : i32, i32
  }
  func.func @transform_5(%arg0: i32) -> (i32, i32) {
    %c0_i32 = arith.constant 0 : i32
    %c0_i32_0 = arith.constant 0 : i32
    return %arg0, %c0_i32 : i32, i32
  }
}

</mosaic_0001>

<llo_original>
// kernel: tpu_custom_call.1
$region0: #{tpu_custom_call.1}
  #allocation0 [shape = 'u32[]', space=smem, size = 0x4, offset = 0x4, fixed_abs, tag = 'smem constant byte address 0x4 - core index']
  #allocation1 [shape = 'u32[72,128]{1,0:T(1,128)}', space=vmem, size = 0x9000, scoped, tag = 'internal scratch']
  %s0 = inlined_call_operand.hbm [shape: f32[8,32], index: 0, kind: input, shape index: {}]
  %s1 = inlined_call_operand.hbm [shape: f32[8,32], index: 1, kind: input, shape index: {}]
  %s2 = inlined_call_operand.hbm [shape: f32[64,128], index: 2, kind: input, shape index: {}]
  %s3 = inlined_call_operand.hbm [shape: f32[64,128], index: 3, kind: input, shape index: {}]
  %s4 = inlined_call_operand.vmem [shape: f32[1,128], index: 4, kind: input, shape index: {}]
  %s5 = inlined_call_operand.hbm [shape: f32[8,128], index: 5, kind: output, shape index: {}]
  %s6 = sld [smem:[#allocation0]]
  $region46: #{tpu_custom_call.1} parent=0
    _
  %s8 = ssub.s32 1, %s6
  %s9 = scalar_select 0, %s8, %s6
  $region1: #{tpu_custom_call.1} parent=0
    #allocation2 [shape = 'u8[4096]{0}', space=vmem, size = 0x1000, scoped, tag = 'input window, operand 0, single buffered']
    #allocation3 [shape = 's32[1]{0}', space=sflag, size = 0x4, scoped, tag = 'scoped memory for tpu_custom_call.1']
    #allocation4 [shape = 's32[1]{0}', space=sflag, size = 0x4, scoped, tag = 'scoped memory for tpu_custom_call.1']
    #allocation5 [shape = 'u8[4096]{0}', space=vmem, size = 0x1000, scoped, tag = 'input window, operand 1, single buffered']
    #allocation6 [shape = 's32[1]{0}', space=sflag, size = 0x4, scoped, tag = 'scoped memory for tpu_custom_call.1']
    #allocation7 [shape = 'u8[16384]{0}', space=vmem, size = 0x4000, scoped, tag = 'input window, operand 2, single buffered']
    #allocation8 [shape = 'u8[16384]{0}', space=vmem, size = 0x4000, scoped, tag = 'input window, operand 3, single buffered']
    #allocation9 [shape = 's32[1]{0}', space=sflag, size = 0x4, scoped, tag = 'scoped memory for tpu_custom_call.1']
    #allocation10 [shape = 'u8[4096]{0}', space=vmem, size = 0x1000, scoped, tag = 'output window, operand 0, single buffered']
    %10 = vsyncpa [#allocation3], 0
    %11 = vsyncpa [#allocation6], 0
    %12 = vsyncpa [#allocation9], 0
    %13 = vsyncpa [#allocation4], 0
    // Predicated region
    $region2: #{tpu_custom_call.1} parent=1 // pred_check
      _
    $region3: #{tpu_custom_call.1} parent=1 // pred_check_branch
      %15 = sbr.rel (0) target = $region5
    $region4: #{tpu_custom_call.1} parent=1 // pred_region
      %17 = vsyncadd [#allocation3], 0
      %s19 = sshll.u32 %s0, 4
      %s20 = int_to_ptr.hbm [resolvable:$true] %s19
      %s21 = sshll.u32 [#allocation2], 4
      %s22 = int_to_ptr.vmem [resolvable:$true] %s21
      %24 = dma.hbm_to_vmem [thread:$0]  %s20, 128, %s22, [#allocation3]
    $region5: #{tpu_custom_call.1} parent=1 // pred_fallthru
      _
    // Predicated region
    $region6: #{tpu_custom_call.1} parent=1 // pred_check
      _
    $region7: #{tpu_custom_call.1} parent=1 // pred_check_branch
      %26 = sbr.rel (0) target = $region9
    $region8: #{tpu_custom_call.1} parent=1 // pred_region
      %28 = vsyncadd [#allocation6], 0
      %s30 = sshll.u32 %s1, 4
      %s31 = int_to_ptr.hbm [resolvable:$true] %s30
      %s32 = sshll.u32 [#allocation5], 4
      %s33 = int_to_ptr.vmem [resolvable:$true] %s32
      %35 = dma.hbm_to_vmem [thread:$0]  %s31, 128, %s33, [#allocation6]
    $region9: #{tpu_custom_call.1} parent=1 // pred_fallthru
      _
    // Predicated region
    $region10: #{tpu_custom_call.1} parent=1 // pred_check
      _
    $region11: #{tpu_custom_call.1} parent=1 // pred_check_branch
      %37 = sbr.rel (0) target = $region13
    $region12: #{tpu_custom_call.1} parent=1 // pred_region
      %39 = vsyncadd [#allocation6], 0
      %s40 = sshll.u32 %s2, 4
      %s41 = int_to_ptr.hbm [resolvable:$true] %s40
      %s42 = sshll.u32 [#allocation7], 4
      %s43 = int_to_ptr.vmem [resolvable:$true] %s42
      %48 = dma.hbm_to_vmem [thread:$0]  %s41, 512, %s43, [#allocation6], 128, 128, 8
    $region13: #{tpu_custom_call.1} parent=1 // pred_fallthru
      _
    // Predicated region
    $region14: #{tpu_custom_call.1} parent=1 // pred_check
      _
    $region15: #{tpu_custom_call.1} parent=1 // pred_check_branch
      %50 = sbr.rel (0) target = $region17
    $region16: #{tpu_custom_call.1} parent=1 // pred_region
      %52 = vsyncadd [#allocation9], 0
      %s53 = scalar_lea.hbm %s3, 32
      %s54 = sshll.u32 %s53, 4
      %s55 = int_to_ptr.hbm [resolvable:$true] %s54
      %s56 = sshll.u32 [#allocation8], 4
      %s57 = int_to_ptr.vmem [resolvable:$true] %s56
      %62 = dma.hbm_to_vmem [thread:$0]  %s55, 512, %s57, [#allocation9], 128, 128, 8
    $region17: #{tpu_custom_call.1} parent=1 // pred_fallthru
      _
    // Predicated region
    $region18: #{tpu_custom_call.1} parent=1 // pred_check
      _
    $region19: #{tpu_custom_call.1} parent=1 // pred_check_branch
      %64 = sbr.rel (0) target = $region21
    $region20: #{tpu_custom_call.1} parent=1 // pred_region
      _
    $region21: #{tpu_custom_call.1} parent=1 // pred_fallthru
      _
    // Predicated region
    $region22: #{tpu_custom_call.1} parent=1 // pred_check
      _
    $region23: #{tpu_custom_call.1} parent=1 // pred_check_branch
      %66 = sbr.rel (0) target = $region25
    $region24: #{tpu_custom_call.1} parent=1 // pred_region
      %68 = dma.done [#allocation3], 128
    $region25: #{tpu_custom_call.1} parent=1 // pred_fallthru
      _
    // Predicated region
    $region26: #{tpu_custom_call.1} parent=1 // pred_check
      _
    $region27: #{tpu_custom_call.1} parent=1 // pred_check_branch
      %70 = sbr.rel (0) target = $region29
    $region28: #{tpu_custom_call.1} parent=1 // pred_region
      %72 = dma.done [#allocation6], 128
    $region29: #{tpu_custom_call.1} parent=1 // pred_fallthru
      _
    // Predicated region
    $region30: #{tpu_custom_call.1} parent=1 // pred_check
      _
    $region31: #{tpu_custom_call.1} parent=1 // pred_check_branch
      %74 = sbr.rel (0) target = $region33
    $region32: #{tpu_custom_call.1} parent=1 // pred_region
      %76 = dma.done [#allocation6], 512
    $region33: #{tpu_custom_call.1} parent=1 // pred_fallthru
      _
    // Predicated region
    $region34: #{tpu_custom_call.1} parent=1 // pred_check
      _
    $region35: #{tpu_custom_call.1} parent=1 // pred_check_branch
      %78 = sbr.rel (0) target = $region37
    $region36: #{tpu_custom_call.1} parent=1 // pred_region
      %80 = dma.done [#allocation9], 512
    $region37: #{tpu_custom_call.1} parent=1 // pred_fallthru
      _
    %v81 = vld [vmem:[%s4] sm:$0x1]
    %v83 = vperm.slane %v81, 0
    %v85 = vld [vmem:[#allocation2] sm:$0xff]
    %v86 = vld [vmem:[#allocation7] sm:$0xff]
    %v87 = vld [vmem:[#allocation7 + $0x8] sm:$0xff]
    %v88 = vld [vmem:[#allocation7 + $0x10] sm:$0xff]
    %v89 = vld [vmem:[#allocation7 + $0x18] sm:$0xff]
    %vm90 = vcmask 261120
    %v92 = vsel %vm90, %v85, 0
    %94 = vmatpush.msra.mxu0 0.0
    %95 = vmatpush.msra.mxu0 0.0
    %96 = vmatpush.msra.mxu0 0.0
    %97 = vmatpush.msra.mxu0 0.0
    %98 = vmatpush.msra.mxu0 0.0
    %99 = vmatpush.msra.mxu0 0.0
    %100 = vmatpush.msra.mxu0 0.0
    %101 = vmatpush.msra.mxu0 0.0
    %102 = vmatpush.msra.mxu0 0.0
    %103 = vmatpush.msra.mxu0 0.0
    %104 = vmatpush.msra.mxu0 0.0
    %105 = vmatpush.msra.mxu0 0.0
    %106 = vmatpush.msra.mxu0 %v89
    %107 = vmatpush.msra.mxu0 %v88
    %108 = vmatpush.msra.mxu0 %v87
    %109 = vmatpush.msra.mxu0 %v86
    %110 = vmatmul.f32.gmra.mxu0 %v92
    %v111 = vpop.f32.mrf.mxu0
    %v112 = vadd.f32 0.0, %v111
    %113 = vdwg.mxu0
    %v114 = vadd.f32 %v83, %v112
    %v115 = vld [vmem:[#allocation5] sm:$0xff]
    %v116 = vld [vmem:[#allocation8] sm:$0xff]
    %v117 = vld [vmem:[#allocation8 + $0x8] sm:$0xff]
    %v118 = vld [vmem:[#allocation8 + $0x10] sm:$0xff]
    %v119 = vld [vmem:[#allocation8 + $0x18] sm:$0xff]
    %v121 = vsel %vm90, %v115, 0
    %123 = vmatpush.msra.mxu0 0.0
    %124 = vmatpush.msra.mxu0 0.0
    %125 = vmatpush.msra.mxu0 0.0
    %126 = vmatpush.msra.mxu0 0.0
    %127 = vmatpush.msra.mxu0 0.0
    %128 = vmatpush.msra.mxu0 0.0
    %129 = vmatpush.msra.mxu0 0.0
    %130 = vmatpush.msra.mxu0 0.0
    %131 = vmatpush.msra.mxu0 0.0
    %132 = vmatpush.msra.mxu0 0.0
    %133 = vmatpush.msra.mxu0 0.0
    %134 = vmatpush.msra.mxu0 0.0
    %135 = vmatpush.msra.mxu0 %v119
    %136 = vmatpush.msra.mxu0 %v118
    %137 = vmatpush.msra.mxu0 %v117
    %138 = vmatpush.msra.mxu0 %v116
    %139 = vmatmul.f32.gmra.mxu0 %v121
    %v140 = vpop.f32.mrf.mxu0
    %v141 = vadd.f32 0.0, %v140
    %142 = vdwg.mxu0
    %v143 = vadd.f32 %v114, %v141
    %144 = vst [vmem:[#allocation10] sm:$0xff] %v143
    // Predicated region
    $region38: #{tpu_custom_call.1} parent=1 // pred_check
      _
    $region39: #{tpu_custom_call.1} parent=1 // pred_check_branch
      %146 = sbr.rel (0) target = $region41
    $region40: #{tpu_custom_call.1} parent=1 // pred_region
      %148 = vsyncadd [#allocation4], 0
      %s150 = sshll.u32 [#allocation10], 4
      %s151 = int_to_ptr.vmem [resolvable:$true] %s150
      %s152 = sshll.u32 %s5, 4
      %s153 = int_to_ptr.hbm [resolvable:$true] %s152
      %155 = dma.vmem_to_hbm [thread:$0]  %s151, 128, %s153, [#allocation4]
    $region41: #{tpu_custom_call.1} parent=1 // pred_fallthru
      _
    // Predicated region
    $region42: #{tpu_custom_call.1} parent=1 // pred_check
      _
    $region43: #{tpu_custom_call.1} parent=1 // pred_check_branch
      %157 = sbr.rel (0) target = $region45
    $region44: #{tpu_custom_call.1} parent=1 // pred_region
      %159 = dma.done [#allocation4], 128
    $region45: #{tpu_custom_call.1} parent=1 // pred_fallthru
      _
    %160 = vsyncpa [#allocation3], 1
    %161 = vsyncpa [#allocation6], 1
    %162 = vsyncpa [#allocation9], 1
    %163 = vsyncpa [#allocation4], 1

</llo_original>
